<compile_context>
chip_gen: v7x
topology: tpu7x:2x2x1
jax: 0.10.0
libtpu: 0.0.40
codegen_flags: <defaults>
</compile_context>

<pallas_src>
import math

import jax
import jax.numpy as jnp
from jax import lax
from jax.experimental import pallas as pl
from jax.experimental.pallas import tpu as pltpu


def _round_up(x: int, m: int) -> int:
    return ((x + m - 1) // m) * m


def _cdiv(a: int, b: int) -> int:
    return (a + b - 1) // b


def _learned_similarity_kernel(
    d_ref,    # [TILE_N, E]  f32  doc tile (streamed, double-buffered)
    w1d_ref,  # [E, H]       f32  doc half of W1^T        (resident)
    b1_ref,   # [1, H]       f32  b1 + query @ W1q^T      (resident)
    w2_ref,   # [H, H2]      f32  W2^T                    (resident)
    b2_ref,   # [1, H2]      f32                          (resident)
    w3_ref,   # [8, H2]      f32  W3 row bcast to 8 sublanes (resident)
    b3_ref,   # [1, 1]       f32  scalar, in SMEM
    o_ref,    # [1, TILE_N]  f32  lane-dense score row for this tile
):
    x = d_ref[...].astype(jnp.float32)

    # Layer 1: docs @ W1d^T + (b1 + q @ W1q^T)  (query term pre-folded into bias)
    h1 = jnp.dot(x, w1d_ref[...], preferred_element_type=jnp.float32) + b1_ref[...]
    h1 = jnp.maximum(h1, 0.0)                       # ReLU (Dropout = identity, eval)

    # Layer 2
    h2 = jnp.dot(h1, w2_ref[...], preferred_element_type=jnp.float32) + b2_ref[...]
    h2 = jnp.maximum(h2, 0.0)                       # ReLU (Dropout = identity, eval)

    # Layer 3, transposed: contract the minor dims of both operands (A @ B^T
    # form) so the doc axis lands on lanes -> [8, TILE_N], rows identical.
    scores8 = lax.dot_general(
        w3_ref[...], h2, (((1,), (1,)), ((), ())),
        preferred_element_type=jnp.float32)
    o_ref[...] = scores8[0:1, :] + b3_ref[0, 0]     # lane-dense [1, TILE_N] store


def learned_similarity(query_emb, doc_embs, params, *, tile_n=None):
    """query_emb: [E] f32, doc_embs: [N, E] f32, params in PyTorch layout.

    params = (w1 [H, 2E], b1 [H], w2 [H2, H], b2 [H2], w3 [1, H2], b3 [1])
    Returns [N] f32 similarity scores.
    """
    w1, b1, w2, b2, w3, b3 = params
    n, e = doc_embs.shape
    h = w1.shape[0]
    h2 = w2.shape[0]

    # ---- fold the (doc-independent) query half of layer 1 into the bias.
    w1q = w1[:, :e]                                   # [H, E] (query columns)
    w1d = w1[:, e:]                                   # [H, E] (doc columns)
    b1_eff = (b1 + jnp.dot(query_emb, w1q.T)).reshape(1, h).astype(jnp.float32)

    # ---- small resident operands (DMA'd once; no feature-dim padding needed).
    w1d_t = w1d.T.astype(jnp.float32)                 # [E, H]
    w2_t = w2.T.astype(jnp.float32)                   # [H, H2]
    b2r = b2.reshape(1, h2).astype(jnp.float32)       # [1, H2]
    w3r8 = jnp.broadcast_to(w3.astype(jnp.float32), (8, h2))   # [8, H2]
    b3s = b3.reshape(1, 1).astype(jnp.float32)        # scalar -> SMEM

    # ---- doc-axis tiling: large tiles amortize per-grid-step overhead; cap at
    # 4096 rows so the per-step VMEM footprint fits v5e's scoped VMEM; aim for
    # >= 4 grid steps so the parallel doc axis keeps both v7x TensorCores busy.
    if tile_n is None:
        tile_n = max(128, min(4096, _round_up(_cdiv(n, 4), 128)))
    tile_n = max(128, _round_up(int(tile_n), 128))
    g = _cdiv(n, tile_n)                              # partial last tile allowed

    out = pl.pallas_call(
        _learned_similarity_kernel,
        out_shape=jax.ShapeDtypeStruct((1, n), jnp.float32),
        grid=(g,),
        in_specs=[
            pl.BlockSpec((tile_n, e), lambda i: (i, 0)),   # docs: streamed
            pl.BlockSpec((e, h), lambda i: (0, 0)),        # W1d^T: resident
            pl.BlockSpec((1, h), lambda i: (0, 0)),        # b1_eff: resident
            pl.BlockSpec((h, h2), lambda i: (0, 0)),       # W2^T: resident
            pl.BlockSpec((1, h2), lambda i: (0, 0)),       # b2: resident
            pl.BlockSpec((8, h2), lambda i: (0, 0)),       # W3 rows: resident
            pl.BlockSpec(memory_space=pltpu.MemorySpace.SMEM),  # b3 scalar
        ],
        out_specs=pl.BlockSpec((1, tile_n), lambda i: (0, i)),
        compiler_params=pltpu.CompilerParams(
            dimension_semantics=("parallel",),        # shard doc tiles across TCs (v7x)
            vmem_limit_bytes=32 * 1024 * 1024,        # headroom on v5e; default elsewhere
        ),
    )(doc_embs, w1d_t, b1_eff, w2_t, b2r, w3r8, b3s)

    return out.reshape(-1)                            # [N] (squeeze(-1))


def init_params(key, embedding_dim, hidden_dim=128):
    """xavier_uniform weights / zero biases in PyTorch [out, in] layout."""
    e, h, h2 = embedding_dim, hidden_dim, hidden_dim // 2

    def xavier(k, shape):                             # shape = (out, in)
        fan_out, fan_in = shape
        bound = math.sqrt(6.0 / (fan_in + fan_out))
        return jax.random.uniform(k, shape, jnp.float32, -bound, bound)

    k1, k2, k3 = jax.random.split(key, 3)
    w1 = xavier(k1, (h, 2 * e))
    w2 = xavier(k2, (h2, h))
    w3 = xavier(k3, (1, h2))
    b1 = jnp.zeros((h,), jnp.float32)
    b2 = jnp.zeros((h2,), jnp.float32)
    b3 = jnp.zeros((1,), jnp.float32)
    return (w1, b1, w2, b2, w3, b3)


def _reference(query_emb, doc_embs, params):
    """Pure-JAX f32 reference matching the PyTorch forward (eval mode)."""
    w1, b1, w2, b2, w3, b3 = params
    n = doc_embs.shape[0]
    q = jnp.broadcast_to(query_emb[None, :], (n, query_emb.shape[0]))
    combined = jnp.concatenate([q, doc_embs], axis=1)
    h1 = jnp.maximum(combined @ w1.T + b1, 0.0)
    h2 = jnp.maximum(h1 @ w2.T + b2, 0.0)
    return (h2 @ w3.T + b3)[:, 0]


if __name__ == "__main__":
    EMBED_DIM = 64
    HIDDEN_DIM = 128      # module default
    NUM_DOCS = 300        # not a tile multiple -> exercises the partial last tile

    key = jax.random.PRNGKey(0)
    kp, kq, kd = jax.random.split(key, 3)

    params = init_params(kp, EMBED_DIM, HIDDEN_DIM)
    query_emb = jax.random.normal(kq, (EMBED_DIM,), jnp.float32)
    doc_embs = jax.random.normal(kd, (NUM_DOCS, EMBED_DIM), jnp.float32)

    # small tile to exercise the multi-step pipelined grid + masked partial tile
    scores = learned_similarity(query_emb, doc_embs, params, tile_n=128)
    scores = jax.block_until_ready(scores)

    ref = _reference(query_emb, doc_embs, params)
    assert scores.shape == (NUM_DOCS,)
    # f32 end-to-end; tolerance covers MXU pass-decomposition differences vs XLA.
    err = float(jnp.max(jnp.abs(scores - ref)))
    assert jnp.allclose(scores, ref, atol=2e-2, rtol=2e-2), (err, scores[:5], ref[:5])

    print("KERNEL_OK")
</pallas_src>

<mosaic_0001>
module attributes {stable_mosaic.version = 11 : i64} {
  func.func @_learned_similarity_kernel(%arg0: i32, %arg1: memref<128x64xf32, #tpu.memory_space<vmem>>, %arg2: memref<64x128xf32, #tpu.memory_space<vmem>>, %arg3: memref<1x128xf32, #tpu.memory_space<vmem>>, %arg4: memref<128x64xf32, #tpu.memory_space<vmem>>, %arg5: memref<1x64xf32, #tpu.memory_space<vmem>>, %arg6: memref<8x64xf32, #tpu.memory_space<vmem>>, %arg7: memref<1x1xf32, #tpu.memory_space<smem>>, %arg8: memref<1x128xf32, #tpu.memory_space<vmem>>) attributes {dimension_semantics = [#tpu.dimension_semantics<parallel>], iteration_bounds = array<i64: 3>, scalar_prefetch = 0 : i64, scratch_operands = 0 : i64, tpu.core_type = #tpu.core_type<tc>, window_params = [{transform_indices = @transform_0, window_bounds = array<i64: 128, 64>}, {pipeline_mode = #tpu.pipeline_mode<synchronous>, transform_indices = @transform_1, window_bounds = array<i64: 64, 128>}, {pipeline_mode = #tpu.pipeline_mode<synchronous>, transform_indices = @transform_2, window_bounds = array<i64: 1, 128>}, {pipeline_mode = #tpu.pipeline_mode<synchronous>, transform_indices = @transform_3, window_bounds = array<i64: 128, 64>}, {pipeline_mode = #tpu.pipeline_mode<synchronous>, transform_indices = @transform_4, window_bounds = array<i64: 1, 64>}, {pipeline_mode = #tpu.pipeline_mode<synchronous>, transform_indices = @transform_5, window_bounds = array<i64: 8, 64>}, {transform_indices = @transform_6, window_bounds = array<i64: 1, 1>}, {transform_indices = @transform_7, window_bounds = array<i64: 1, 128>}]} {
    %c0 = arith.constant 0 : index
    %c0_0 = arith.constant 0 : index
    %0 = vector.load %arg1[%c0, %c0_0] : memref<128x64xf32, #tpu.memory_space<vmem>>, vector<128x64xf32>
    %c0_1 = arith.constant 0 : index
    %c0_2 = arith.constant 0 : index
    %1 = vector.load %arg2[%c0_1, %c0_2] : memref<64x128xf32, #tpu.memory_space<vmem>>, vector<64x128xf32>
    %cst = arith.constant dense<0.000000e+00> : vector<128x128xf32>
    %2 = tpu.matmul %0, %1, %cst {dimension_numbers = #tpu.dot_dimension_numbers<[1], [0], [0], [1], [0, 0, 1, 1], [], []>} : vector<128x64xf32>, vector<64x128xf32>, vector<128x128xf32> -> vector<128x128xf32>
    %c0_3 = arith.constant 0 : index
    %c0_4 = arith.constant 0 : index
    %3 = vector.load %arg3[%c0_3, %c0_4] : memref<1x128xf32, #tpu.memory_space<vmem>>, vector<1x128xf32>
    %4 = vector.broadcast %3 : vector<1x128xf32> to vector<128x128xf32>
    %5 = arith.addf %2, %4 : vector<128x128xf32>
    %cst_5 = arith.constant 0.000000e+00 : f32
    %6 = vector.broadcast %cst_5 : f32 to vector<128x128xf32>
    %7 = arith.maximumf %5, %6 : vector<128x128xf32>
    %c0_6 = arith.constant 0 : index
    %c0_7 = arith.constant 0 : index
    %8 = vector.load %arg4[%c0_6, %c0_7] : memref<128x64xf32, #tpu.memory_space<vmem>>, vector<128x64xf32>
    %cst_8 = arith.constant dense<0.000000e+00> : vector<128x64xf32>
    %9 = tpu.matmul %7, %8, %cst_8 {dimension_numbers = #tpu.dot_dimension_numbers<[1], [0], [0], [1], [0, 0, 1, 1], [], []>} : vector<128x128xf32>, vector<128x64xf32>, vector<128x64xf32> -> vector<128x64xf32>
    %c0_9 = arith.constant 0 : index
    %c0_10 = arith.constant 0 : index
    %10 = vector.load %arg5[%c0_9, %c0_10] : memref<1x64xf32, #tpu.memory_space<vmem>>, vector<1x64xf32>
    %11 = vector.broadcast %10 : vector<1x64xf32> to vector<128x64xf32>
    %12 = arith.addf %9, %11 : vector<128x64xf32>
    %cst_11 = arith.constant 0.000000e+00 : f32
    %13 = vector.broadcast %cst_11 : f32 to vector<128x64xf32>
    %14 = arith.maximumf %12, %13 : vector<128x64xf32>
    %c0_12 = arith.constant 0 : index
    %c0_13 = arith.constant 0 : index
    %15 = vector.load %arg6[%c0_12, %c0_13] : memref<8x64xf32, #tpu.memory_space<vmem>>, vector<8x64xf32>
    %cst_14 = arith.constant dense<0.000000e+00> : vector<8x128xf32>
    %16 = tpu.matmul %15, %14, %cst_14 {dimension_numbers = #tpu.dot_dimension_numbers<[1], [1], [0], [0], [0, 0, 1, 0], [], []>} : vector<8x64xf32>, vector<128x64xf32>, vector<8x128xf32> -> vector<8x128xf32>
    %17 = vector.extract_strided_slice %16 {offsets = [0, 0], sizes = [1, 128], strides = [1, 1]} : vector<8x128xf32> to vector<1x128xf32>
    %c0_15 = arith.constant 0 : index
    %c0_16 = arith.constant 0 : index
    %18 = memref.load %arg7[%c0_15, %c0_16] : memref<1x1xf32, #tpu.memory_space<smem>>
    %19 = vector.broadcast %18 : f32 to vector<1x128xf32>
    %20 = arith.addf %17, %19 : vector<1x128xf32>
    %c0_17 = arith.constant 0 : index
    %c0_18 = arith.constant 0 : index
    %21 = vector.load %arg8[%c0_17, %c0_18] : memref<1x128xf32, #tpu.memory_space<vmem>>, vector<1x128xf32>
    tpu.vector_store %arg8[%c0_17, %c0_18], %20 {strides = array<i32>} : memref<1x128xf32, #tpu.memory_space<vmem>>, vector<1x128xf32>,
    return
  }
  func.func @transform_0(%arg0: i32) -> (i32, i32) {
    %c0_i32 = arith.constant 0 : i32
    %c0_i32_0 = arith.constant 0 : i32
    return %arg0, %c0_i32 : i32, i32
  }
  func.func @transform_1(%arg0: i32) -> (i32, i32) {
    %c0_i32 = arith.constant 0 : i32
    %c0_i32_0 = arith.constant 0 : i32
    %c0_i32_1 = arith.constant 0 : i32
    return %c0_i32, %c0_i32_0 : i32, i32
  }
  func.func @transform_2(%arg0: i32) -> (i32, i32) {
    %c0_i32 = arith.constant 0 : i32
    %c0_i32_0 = arith.constant 0 : i32
    %c0_i32_1 = arith.constant 0 : i32
    return %c0_i32, %c0_i32_0 : i32, i32
  }
  func.func @transform_3(%arg0: i32) -> (i32, i32) {
    %c0_i32 = arith.constant 0 : i32
    %c0_i32_0 = arith.constant 0 : i32
    %c0_i32_1 = arith.constant 0 : i32
    return %c0_i32, %c0_i32_0 : i32, i32
  }
  func.func @transform_4(%arg0: i32) -> (i32, i32) {
    %c0_i32 = arith.constant 0 : i32
    %c0_i32_0 = arith.constant 0 : i32
    %c0_i32_1 = arith.constant 0 : i32
    return %c0_i32, %c0_i32_0 : i32, i32
  }
  func.func @transform_5(%arg0: i32) -> (i32, i32) {
    %c0_i32 = arith.constant 0 : i32
    %c0_i32_0 = arith.constant 0 : i32
    %c0_i32_1 = arith.constant 0 : i32
    return %c0_i32, %c0_i32_0 : i32, i32
  }
  func.func @transform_6(%arg0: i32) -> (i32, i32) {
    %c0_i32 = arith.constant 0 : i32
    %c0_i32_0 = arith.constant 0 : i32
    %c0_i32_1 = arith.constant 0 : i32
    return %c0_i32, %c0_i32_0 : i32, i32
  }
  func.func @transform_7(%arg0: i32) -> (i32, i32) {
    %c0_i32 = arith.constant 0 : i32
    %c0_i32_0 = arith.constant 0 : i32
    return %c0_i32, %arg0 : i32, i32
  }
}

</mosaic_0001>

<llo_original>
// kernel: tpu_custom_call.1
$region0: #{tpu_custom_call.1}
  #allocation0 [shape = 'u32[]', space=smem, size = 0x4, offset = 0x4, fixed_abs, tag = 'smem constant byte address 0x4 - core index']
  #allocation1 [shape = 'u32[144,128]{1,0:T(1,128)}', space=vmem, size = 0x12000, scoped, tag = 'internal scratch']
  #allocation2 [shape = 'f32[1,1]{1,0:T(1,128)S(6)}', space=smem, size = 0x200, scoped, tag = 'scoped memory for tpu_custom_call.1']
  %s0 = inlined_call_operand.vmem [shape: f32[300,64], index: 0, kind: input, shape index: {}]
  %s1 = inlined_call_operand.vmem [shape: f32[64,128], index: 1, kind: input, shape index: {}]
  %s2 = inlined_call_operand.vmem [shape: f32[1,128], index: 2, kind: input, shape index: {}]
  %s3 = inlined_call_operand.vmem [shape: f32[128,64], index: 3, kind: input, shape index: {}]
  %s4 = inlined_call_operand.vmem [shape: f32[1,64], index: 4, kind: input, shape index: {}]
  %s5 = inlined_call_operand.vmem [shape: f32[8,64], index: 5, kind: input, shape index: {}]
  %s6 = inlined_call_operand.<no memory space> [shape: f32[1,1], index: 6, kind: input, shape index: {}]
  %s7 = inlined_call_operand.hbm [shape: f32[1,300], index: 7, kind: output, shape index: {}]
  %s8 = sld [smem:[#allocation0]]
  $region61: #{tpu_custom_call.1} parent=0
    _
  %s10 = ssub.s32 1, %s8
  %s11 = scalar_select 0, %s10, %s8
  %12 = sst [smem:[#allocation2]] %s6
  $region1: #{tpu_custom_call.1} parent=0
    #allocation3 [shape = 'u8[1024]{0}', space=vmem, size = 0x400, scoped, tag = 'output window, operand 0']
    #allocation4 [shape = 's32[2]{0}', space=sflag, size = 0x8, scoped, tag = 'scoped memory for tpu_custom_call.1']
    %13 = vsyncpa [#allocation4], 0
    %s14 = scalar_lea.sflag [#allocation4], 1
    %15 = vsyncpa %s14, 0
    loop: start=0, step=1, limit=5
    $region2: #{tpu_custom_call.1} parent=1 // loop_pre_header
      _
    $region3: #{tpu_custom_call.1} parent=1 // loop_header
      %s17 = sphi 0, %s21
      %p18 = scmp.ge.s32.totalorder %s17, 5
      %s27 = sphi 0, %s29
      %s30 = sphi 0, %s27
      %s31 = sphi 0, %s30
      %s47 = sphi 0, %s31
      %s51 = sphi 0, %s51
      %s53 = sphi 0, %s51
      %s54 = sphi 0, %s53
      %s68 = sphi 0, %s54
      %s72 = sphi 0, %s72
      %s74 = sphi 0, %s72
      %s75 = sphi 0, %s74
      %s89 = sphi 0, %s75
      %s93 = sphi 0, %s93
      %s95 = sphi 0, %s93
      %s96 = sphi 0, %s95
      %s110 = sphi 0, %s96
      %s114 = sphi 0, %s114
      %s116 = sphi 0, %s114
      %s117 = sphi 0, %s116
      %s131 = sphi 0, %s117
      %s135 = sphi 0, %s135
      %s137 = sphi 0, %s135
      %s138 = sphi 0, %s137
      %s152 = sphi 0, %s138
      %s156 = sphi 0, %s156
      %s158 = sphi 0, %s156
      %s159 = sphi 0, %s158
      %s173 = sphi 0, %s159
      %s179 = sphi 0, %s181
      %s182 = sphi 0, %s179
      %s183 = sphi 0, %s182
      %s199 = sphi 0, %s183
    $region4: #{tpu_custom_call.1} parent=1 // loop_header_branch
      %20 = sbr.rel (%p18) target = $region8
    $region5: #{tpu_custom_call.1} parent=1 // loop_body
      %s22 = ssub.s32 %s17, 1
      %s23 = ssub.s32 %s17, 2
      %s24 = sadd.s32 %s17, 1
      %s25 = ssub.s32 %s17, %s24
      %p26 = scmp.eq.s32.totalorder %s25, 0
      %s28 = sadd.s32 %s27, 1
      %s29 = scalar_select %p26, %s27, %s28
      %p32 = pneg %p26
      %p33 = scmp.eq.s32.totalorder %s17, 2
      %p34 = por %p32, %p33
      %p35 = scmp.ne.s32.totalorder %s27, %s30
      %p36 = scmp.eq.s32.totalorder %s17, 0
      %p37 = por %p35, %p36
      %p38 = scmp.ne.s32.totalorder %s27, %s30
      %p39 = scmp.eq.s32.totalorder %s22, 2
      %p40 = por %p38, %p39
      %p41 = scmp.ne.s32.totalorder %s30, %s31
      %p42 = scmp.eq.s32.totalorder %s22, 0
      %p43 = por %p41, %p42
      %p44 = scmp.ne.s32.totalorder %s30, %s31
      %p45 = scmp.eq.s32.totalorder %s23, 2
      %p46 = por %p44, %p45
      %p48 = scmp.ne.s32.totalorder %s31, %s47
      %p49 = scmp.eq.s32.totalorder %s23, 0
      %p50 = por %p48, %p49
      %s52 = sadd.s32 %s51, 1
      %p55 = scmp.eq.s32.totalorder %s17, 2
      %p56 = scmp.ne.s32.totalorder %s51, %s53
      %p57 = scmp.eq.s32.totalorder %s17, 0
      %p58 = por %p56, %p57
      %p59 = scmp.ne.s32.totalorder %s51, %s53
      %p60 = scmp.eq.s32.totalorder %s22, 2
      %p61 = por %p59, %p60
      %p62 = scmp.ne.s32.totalorder %s53, %s54
      %p63 = scmp.eq.s32.totalorder %s22, 0
      %p64 = por %p62, %p63
      %p65 = scmp.ne.s32.totalorder %s53, %s54
      %p66 = scmp.eq.s32.totalorder %s23, 2
      %p67 = por %p65, %p66
      %p69 = scmp.ne.s32.totalorder %s54, %s68
      %p70 = scmp.eq.s32.totalorder %s23, 0
      %p71 = por %p69, %p70
      %s73 = sadd.s32 %s72, 1
      %p76 = scmp.eq.s32.totalorder %s17, 2
      %p77 = scmp.ne.s32.totalorder %s72, %s74
      %p78 = scmp.eq.s32.totalorder %s17, 0
      %p79 = por %p77, %p78
      %p80 = scmp.ne.s32.totalorder %s72, %s74
      %p81 = scmp.eq.s32.totalorder %s22, 2
      %p82 = por %p80, %p81
      %p83 = scmp.ne.s32.totalorder %s74, %s75
      %p84 = scmp.eq.s32.totalorder %s22, 0
      %p85 = por %p83, %p84
      %p86 = scmp.ne.s32.totalorder %s74, %s75
      %p87 = scmp.eq.s32.totalorder %s23, 2
      %p88 = por %p86, %p87
      %p90 = scmp.ne.s32.totalorder %s75, %s89
      %p91 = scmp.eq.s32.totalorder %s23, 0
      %p92 = por %p90, %p91
      %s94 = sadd.s32 %s93, 1
      %p97 = scmp.eq.s32.totalorder %s17, 2
      %p98 = scmp.ne.s32.totalorder %s93, %s95
      %p99 = scmp.eq.s32.totalorder %s17, 0
      %p100 = por %p98, %p99
      %p101 = scmp.ne.s32.totalorder %s93, %s95
      %p102 = scmp.eq.s32.totalorder %s22, 2
      %p103 = por %p101, %p102
      %p104 = scmp.ne.s32.totalorder %s95, %s96
      %p105 = scmp.eq.s32.totalorder %s22, 0
      %p106 = por %p104, %p105
      %p107 = scmp.ne.s32.totalorder %s95, %s96
      %p108 = scmp.eq.s32.totalorder %s23, 2
      %p109 = por %p107, %p108
      %p111 = scmp.ne.s32.totalorder %s96, %s110
      %p112 = scmp.eq.s32.totalorder %s23, 0
      %p113 = por %p111, %p112
      %s115 = sadd.s32 %s114, 1
      %p118 = scmp.eq.s32.totalorder %s17, 2
      %p119 = scmp.ne.s32.totalorder %s114, %s116
      %p120 = scmp.eq.s32.totalorder %s17, 0
      %p121 = por %p119, %p120
      %p122 = scmp.ne.s32.totalorder %s114, %s116
      %p123 = scmp.eq.s32.totalorder %s22, 2
      %p124 = por %p122, %p123
      %p125 = scmp.ne.s32.totalorder %s116, %s117
      %p126 = scmp.eq.s32.totalorder %s22, 0
      %p127 = por %p125, %p126
      %p128 = scmp.ne.s32.totalorder %s116, %s117
      %p129 = scmp.eq.s32.totalorder %s23, 2
      %p130 = por %p128, %p129
      %p132 = scmp.ne.s32.totalorder %s117, %s131
      %p133 = scmp.eq.s32.totalorder %s23, 0
      %p134 = por %p132, %p133
      %s136 = sadd.s32 %s135, 1
      %p139 = scmp.eq.s32.totalorder %s17, 2
      %p140 = scmp.ne.s32.totalorder %s135, %s137
      %p141 = scmp.eq.s32.totalorder %s17, 0
      %p142 = por %p140, %p141
      %p143 = scmp.ne.s32.totalorder %s135, %s137
      %p144 = scmp.eq.s32.totalorder %s22, 2
      %p145 = por %p143, %p144
      %p146 = scmp.ne.s32.totalorder %s137, %s138
      %p147 = scmp.eq.s32.totalorder %s22, 0
      %p148 = por %p146, %p147
      %p149 = scmp.ne.s32.totalorder %s137, %s138
      %p150 = scmp.eq.s32.totalorder %s23, 2
      %p151 = por %p149, %p150
      %p153 = scmp.ne.s32.totalorder %s138, %s152
      %p154 = scmp.eq.s32.totalorder %s23, 0
      %p155 = por %p153, %p154
      %s157 = sadd.s32 %s156, 1
      %p160 = scmp.eq.s32.totalorder %s17, 2
      %p161 = scmp.ne.s32.totalorder %s156, %s158
      %p162 = scmp.eq.s32.totalorder %s17, 0
      %p163 = por %p161, %p162
      %p164 = scmp.ne.s32.totalorder %s156, %s158
      %p165 = scmp.eq.s32.totalorder %s22, 2
      %p166 = por %p164, %p165
      %p167 = scmp.ne.s32.totalorder %s158, %s159
      %p168 = scmp.eq.s32.totalorder %s22, 0
      %p169 = por %p167, %p168
      %p170 = scmp.ne.s32.totalorder %s158, %s159
      %p171 = scmp.eq.s32.totalorder %s23, 2
      %p172 = por %p170, %p171
      %p174 = scmp.ne.s32.totalorder %s159, %s173
      %p175 = scmp.eq.s32.totalorder %s23, 0
      %p176 = por %p174, %p175
      %s177 = ssub.s32 %s17, %s24
      %p178 = scmp.eq.s32.totalorder %s177, 0
      %s180 = sadd.s32 %s179, 1
      %s181 = scalar_select %p178, %s179, %s180
      %p184 = pneg %p178
      %p185 = scmp.eq.s32.totalorder %s17, 2
      %p186 = por %p184, %p185
      %p187 = scmp.ne.s32.totalorder %s179, %s182
      %p188 = scmp.eq.s32.totalorder %s17, 0
      %p189 = por %p187, %p188
      %p190 = scmp.ne.s32.totalorder %s179, %s182
      %p191 = scmp.eq.s32.totalorder %s22, 2
      %p192 = por %p190, %p191
      %p193 = scmp.ne.s32.totalorder %s182, %s183
      %p194 = scmp.eq.s32.totalorder %s22, 0
      %p195 = por %p193, %p194
      %p196 = scmp.ne.s32.totalorder %s182, %s183
      %p197 = scmp.eq.s32.totalorder %s23, 2
      %p198 = por %p196, %p197
      %p200 = scmp.ne.s32.totalorder %s183, %s199
      %p201 = scmp.eq.s32.totalorder %s23, 0
      %p202 = por %p200, %p201
      %p203 = scmp.le.s32.totalorder 1, %s17
      %p204 = scmp.lt.s32.totalorder %s17, 4
      %p205 = pnand %p203, %p204
      %p206 = pneg %p205
      // Predicated region
      $region9: #{tpu_custom_call.1} parent=5 // pred_check
        _
      $region10: #{tpu_custom_call.1} parent=5 // pred_check_branch
        %208 = sbr.rel (%p205) target = $region12
      $region11: #{tpu_custom_call.1} parent=5 // pred_region
        %s209 = ssub.s32 %s17, 1
        // Predicated region
        $region13: #{tpu_custom_call.1} parent=11 // pred_check
          %p210 = pneg %p64
        $region14: #{tpu_custom_call.1} parent=11 // pred_check_branch
          %212 = sbr.rel (%p210) target = $region16
        $region15: #{tpu_custom_call.1} parent=11 // pred_region
          _
        $region16: #{tpu_custom_call.1} parent=11 // pred_fallthru
          _
        // Predicated region
        $region17: #{tpu_custom_call.1} parent=11 // pred_check
          %p213 = pneg %p85
        $region18: #{tpu_custom_call.1} parent=11 // pred_check_branch
          %215 = sbr.rel (%p213) target = $region20
        $region19: #{tpu_custom_call.1} parent=11 // pred_region
          _
        $region20: #{tpu_custom_call.1} parent=11 // pred_fallthru
          _
        // Predicated region
        $region21: #{tpu_custom_call.1} parent=11 // pred_check
          %p216 = pneg %p106
        $region22: #{tpu_custom_call.1} parent=11 // pred_check_branch
          %218 = sbr.rel (%p216) target = $region24
        $region23: #{tpu_custom_call.1} parent=11 // pred_region
          _
        $region24: #{tpu_custom_call.1} parent=11 // pred_fallthru
          _
        // Predicated region
        $region25: #{tpu_custom_call.1} parent=11 // pred_check
          %p219 = pneg %p127
        $region26: #{tpu_custom_call.1} parent=11 // pred_check_branch
          %221 = sbr.rel (%p219) target = $region28
        $region27: #{tpu_custom_call.1} parent=11 // pred_region
          _
        $region28: #{tpu_custom_call.1} parent=11 // pred_fallthru
          _
        // Predicated region
        $region29: #{tpu_custom_call.1} parent=11 // pred_check
          %p222 = pneg %p148
        $region30: #{tpu_custom_call.1} parent=11 // pred_check_branch
          %224 = sbr.rel (%p222) target = $region32
        $region31: #{tpu_custom_call.1} parent=11 // pred_region
          _
        $region32: #{tpu_custom_call.1} parent=11 // pred_fallthru
          _
        // Predicated region
        $region33: #{tpu_custom_call.1} parent=11 // pred_check
          %p225 = pneg %p169
        $region34: #{tpu_custom_call.1} parent=11 // pred_check_branch
          %227 = sbr.rel (%p225) target = $region36
        $region35: #{tpu_custom_call.1} parent=11 // pred_region
          _
        $region36: #{tpu_custom_call.1} parent=11 // pred_fallthru
          _
      $region12: #{tpu_custom_call.1} parent=5 // pred_fallthru
        _
      %p228 = scmp.lt.s32.totalorder %s17, 3
      // Predicated region
      $region37: #{tpu_custom_call.1} parent=5 // pred_check
        %p229 = pneg %p228
      $region38: #{tpu_custom_call.1} parent=5 // pred_check_branch
        %231 = sbr.rel (%p229) target = $region40
      $region39: #{tpu_custom_call.1} parent=5 // pred_region
        // Predicated region
        $region41: #{tpu_custom_call.1} parent=39 // pred_check
          %p232 = pneg %p37
        $region42: #{tpu_custom_call.1} parent=39 // pred_check_branch
          %234 = sbr.rel (%p232) target = $region44
        $region43: #{tpu_custom_call.1} parent=39 // pred_region
          %s235 = smul.u32 16, %s17
          %s236 = ssub.s32 38, %s235
          %p237 = scmp.lt.s32.totalorder %s236, 16
          %s238 = scalar_select %p237, %s236, 16
          %s239 = smul.u32 128, %s238
          %p240 = scmp.lt.s32.totalorder %s235, 37
          %s241 = scalar_select %p240, %s235, 37
          %s242 = smul.addr %s241, 8
          %s243 = scalar_lea.vmem %s0, %s242
          %s244 = smul.u32 16, %s17
          %s245 = ssub.s32 38, %s244
          %p246 = scmp.lt.s32.totalorder %s245, 16
          %s247 = scalar_select %p246, %s245, 16
          %s248 = smul.u32 128, %s247
        $region44: #{tpu_custom_call.1} parent=39 // pred_fallthru
          _
      $region40: #{tpu_custom_call.1} parent=5 // pred_fallthru
        _
      %p249 = scmp.le.s32.totalorder 1, %s17
      %p250 = scmp.lt.s32.totalorder %s17, 4
      %p251 = pnand %p249, %p250
      %p252 = pneg %p251
      // Predicated region
      $region45: #{tpu_custom_call.1} parent=5 // pred_check
        _
      $region46: #{tpu_custom_call.1} parent=5 // pred_check_branch
        %254 = sbr.rel (%p251) target = $region48
      $region47: #{tpu_custom_call.1} parent=5 // pred_region
        %s255 = ssub.s32 %s17, 1
        %s256 = smul.u32 16, %s22
        %s257 = ssub.s32 38, %s256
        %p258 = scmp.lt.s32.totalorder %s257, 16
        %s259 = scalar_select %p258, %s257, 16
        %s260 = smul.u32 128, %s259
        %p261 = scmp.lt.s32.totalorder %s256, 37
        %s262 = scalar_select %p261, %s256, 37
        %s263 = smul.addr %s262, 8
        %s264 = scalar_lea.vmem %s0, %s263
        %p265 = pneg %p43
        %p266 = pneg %p40
        %p267 = pneg %p64
        %p268 = pneg %p61
        %p269 = pneg %p85
        %p270 = pneg %p82
        %p271 = pneg %p106
        %p272 = pneg %p103
        %p273 = pneg %p127
        %p274 = pneg %p124
        %p275 = pneg %p148
        %p276 = pneg %p145
        %p277 = pneg %p169
        %p278 = pneg %p166
        %p279 = pneg %p195
        %p280 = pneg %p192
        %s281 = sand.u32 %s182, 1
        %s282 = scalar_lea.sflag [#allocation4], %s281
        %s283 = sand.u32 %s182, 1
        %s284 = scalar_lea.vmem [#allocation3], %s283
        %s285 = smul.u32 16, %s22
        %s286 = ssub.s32 38, %s285
        %p287 = scmp.lt.s32.totalorder %s286, 16
        %s288 = scalar_select %p287, %s286, 16
        %s289 = smul.u32 128, %s288
        %p290 = scmp.lt.s32.totalorder %s285, 37
        %s291 = scalar_select %p290, %s285, 37
        %s292 = smul.addr %s291, 8
        %s293 = scalar_lea.vmem %s0, %s292
        %s294 = smul.u32 16, %s22
        %s295 = ssub.s32 38, %s294
        %p296 = scmp.lt.s32.totalorder %s295, 16
        %s297 = scalar_select %p296, %s295, 16
        %s298 = smul.u32 128, %s297
        %v299 = vld [vmem:[%s293] sm:$0xff]
        %v300 = vld [vmem:[%s293 + $0x8] sm:$0xff]
        %v301 = vld [vmem:[%s293 + $0x10] sm:$0xff]
        %v302 = vld [vmem:[%s293 + $0x18] sm:$0xff]
        %v303 = vld [vmem:[%s293 + $0x20] sm:$0xff]
        %v304 = vld [vmem:[%s293 + $0x28] sm:$0xff]
        %v305 = vld [vmem:[%s293 + $0x30] sm:$0xff]
        %v306 = vld [vmem:[%s293 + $0x38] sm:$0xff]
        %v307 = vld [vmem:[%s293 + $0x40] sm:$0xff]
        %v308 = vld [vmem:[%s293 + $0x48] sm:$0xff]
        %v309 = vld [vmem:[%s293 + $0x50] sm:$0xff]
        %v310 = vld [vmem:[%s293 + $0x58] sm:$0xff]
        %v311 = vld [vmem:[%s293 + $0x60] sm:$0xff]
        %v312 = vld [vmem:[%s293 + $0x68] sm:$0xff]
        %v313 = vld [vmem:[%s293 + $0x70] sm:$0xff]
        %v314 = vld [vmem:[%s293 + $0x78] sm:$0xff]
        %v315 = vld [vmem:[%s1] sm:$0xff]
        %v316 = vld [vmem:[%s1 + $0x8] sm:$0xff]
        %v317 = vld [vmem:[%s1 + $0x10] sm:$0xff]
        %v318 = vld [vmem:[%s1 + $0x18] sm:$0xff]
        %v319 = vld [vmem:[%s1 + $0x20] sm:$0xff]
        %v320 = vld [vmem:[%s1 + $0x28] sm:$0xff]
        %v321 = vld [vmem:[%s1 + $0x30] sm:$0xff]
        %v322 = vld [vmem:[%s1 + $0x38] sm:$0xff]
        %v323 = vld [vmem:[%s2] sm:$0x1]
        %v325 = vlaneseq
        %v326 = vshrl.u32 %v325, 7
        %v327 = vsub.s32 0, %v326
        %v328 = vrot.slane %v323, %v327
        %vm330 = vcmask 523264
        %v332 = vsel %vm330, %v299, 0
        %v335 = vsel %vm330, %v300, 0
        %v338 = vsel %vm330, %v301, 0
        %v341 = vsel %vm330, %v302, 0
        %v344 = vsel %vm330, %v303, 0
        %v347 = vsel %vm330, %v304, 0
        %v350 = vsel %vm330, %v305, 0
        %v353 = vsel %vm330, %v306, 0
        %v356 = vsel %vm330, %v307, 0
        %v359 = vsel %vm330, %v308, 0
        %v362 = vsel %vm330, %v309, 0
        %v365 = vsel %vm330, %v310, 0
        %v368 = vsel %vm330, %v311, 0
        %v371 = vsel %vm330, %v312, 0
        %v374 = vsel %vm330, %v313, 0
        %v377 = vsel %vm330, %v314, 0
        %379 = vmatprep.subr.mxu0 0.0
        %380 = vmatpush1.msra.mxu0 %v315
        %381 = vmatprep.subr.mxu0 0.0
        %382 = vmatpush1.msra.mxu0 %v316
        %383 = vmatprep.subr.mxu0 0.0
        %384 = vmatpush1.msra.mxu0 %v317
        %385 = vmatprep.subr.mxu0 0.0
        %386 = vmatpush1.msra.mxu0 %v318
        %387 = vmatprep.subr.mxu0 0.0
        %388 = vmatpush1.msra.mxu0 %v319
        %389 = vmatprep.subr.mxu0 0.0
        %390 = vmatpush1.msra.mxu0 %v320
        %391 = vmatprep.subr.mxu0 0.0
        %392 = vmatpush1.msra.mxu0 %v321
        %393 = vmatprep.subr.mxu0 0.0
        %394 = vmatpush1.msra.mxu0 %v322
        %395 = vmatprep.subr.mxu0 0.0
        %396 = vmatpush1.msra.mxu0 0.0
        %397 = vmatprep.subr.mxu0 0.0
        %398 = vmatpush1.msra.mxu0 0.0
        %399 = vmatprep.subr.mxu0 0.0
        %400 = vmatpush1.msra.mxu0 0.0
        %401 = vmatprep.subr.mxu0 0.0
        %402 = vmatpush1.msra.mxu0 0.0
        %403 = vmatprep.subr.mxu0 0.0
        %404 = vmatpush1.msra.mxu0 0.0
        %405 = vmatprep.subr.mxu0 0.0
        %406 = vmatpush1.msra.mxu0 0.0
        %407 = vmatprep.subr.mxu0 0.0
        %408 = vmatpush1.msra.mxu0 0.0
        %409 = vmatprep.subr.mxu0 0.0
        %410 = vmatpush1.msra.mxu0 0.0
        %411 = vmatprep.subr.mxu0 0.0
        %412 = vmatpush1.msra.mxu0 0.0
        %413 = vmatprep.subr.mxu0 0.0
        %414 = vmatpush1.msra.mxu0 0.0
        %415 = vmatprep.subr.mxu0 0.0
        %416 = vmatpush1.msra.mxu0 0.0
        %417 = vmatprep.subr.mxu0 0.0
        %418 = vmatpush1.msra.mxu0 0.0
        %419 = vmatprep.subr.mxu0 0.0
        %420 = vmatpush1.msra.mxu0 0.0
        %421 = vmatprep.subr.mxu0 0.0
        %422 = vmatpush1.msra.mxu0 0.0
        %423 = vmatprep.subr.mxu0 0.0
        %424 = vmatpush1.msra.mxu0 0.0
        %425 = vmatprep.subr.mxu0 0.0
        %426 = vmatpush1.msra.mxu0 0.0
        %427 = vmatprep.subr.mxu0 0.0
        %428 = vmatpush1.msra.mxu0 0.0
        %429 = vmatprep.subr.mxu0 0.0
        %430 = vmatpush1.msra.mxu0 0.0
        %431 = vmatprep.subr.mxu0 0.0
        %432 = vmatpush1.msra.mxu0 0.0
        %433 = vmatprep.subr.mxu0 0.0
        %434 = vmatpush1.msra.mxu0 0.0
        %435 = vmatprep.subr.mxu0 0.0
        %436 = vmatpush1.msra.mxu0 0.0
        %437 = vmatprep.subr.mxu0 0.0
        %438 = vmatpush1.msra.mxu0 0.0
        %439 = vmatprep.subr.mxu0 0.0
        %440 = vmatpush1.msra.mxu0 0.0
        %441 = vmatprep.subr.mxu0 0.0
        %442 = vmatpush1.msra.mxu0 0.0
        %443 = vmatprep.mubr.f32.mxu0 0.0
        %444 = vmatmul.mubr.f32.gmra.mrb[0].mxu0 %v332
        %v445 = vpop.f32.mrb[0].mxu0
        %v446 = vadd.f32 %v328, %v445
        %v447 = vpop.f32.mrb[0].mxu0
        %448 = vmatprep.mubr.f32.mxu0 0.0
        %449 = vmatmul.mubr.f32.gmra.mrb[0].mxu0 %v335
        %v450 = vpop.f32.mrb[0].mxu0
        %v451 = vadd.f32 %v328, %v450
        %v452 = vpop.f32.mrb[0].mxu0
        %453 = vmatprep.mubr.f32.mxu0 0.0
        %454 = vmatmul.mubr.f32.gmra.mrb[0].mxu0 %v338
        %v455 = vpop.f32.mrb[0].mxu0
        %v456 = vadd.f32 %v328, %v455
        %v457 = vpop.f32.mrb[0].mxu0
        %458 = vmatprep.mubr.f32.mxu0 0.0
        %459 = vmatmul.mubr.f32.gmra.mrb[0].mxu0 %v341
        %v460 = vpop.f32.mrb[0].mxu0
        %v461 = vadd.f32 %v328, %v460
        %v462 = vpop.f32.mrb[0].mxu0
        %463 = vmatprep.mubr.f32.mxu0 0.0
        %464 = vmatmul.mubr.f32.gmra.mrb[0].mxu0 %v344
        %v465 = vpop.f32.mrb[0].mxu0
        %v466 = vadd.f32 %v328, %v465
        %v467 = vpop.f32.mrb[0].mxu0
        %468 = vmatprep.mubr.f32.mxu0 0.0
        %469 = vmatmul.mubr.f32.gmra.mrb[0].mxu0 %v347
        %v470 = vpop.f32.mrb[0].mxu0
        %v471 = vadd.f32 %v328, %v470
        %v472 = vpop.f32.mrb[0].mxu0
        %473 = vmatprep.mubr.f32.mxu0 0.0
        %474 = vmatmul.mubr.f32.gmra.mrb[0].mxu0 %v350
        %v475 = vpop.f32.mrb[0].mxu0
        %v476 = vadd.f32 %v328, %v475
        %v477 = vpop.f32.mrb[0].mxu0
        %478 = vmatprep.mubr.f32.mxu0 0.0
        %479 = vmatmul.mubr.f32.gmra.mrb[0].mxu0 %v353
        %v480 = vpop.f32.mrb[0].mxu0
        %v481 = vadd.f32 %v328, %v480
        %v482 = vpop.f32.mrb[0].mxu0
        %483 = vmatprep.mubr.f32.mxu0 0.0
        %484 = vmatmul.mubr.f32.gmra.mrb[0].mxu0 %v356
        %v485 = vpop.f32.mrb[0].mxu0
        %v486 = vadd.f32 %v328, %v485
        %v487 = vpop.f32.mrb[0].mxu0
        %488 = vmatprep.mubr.f32.mxu0 0.0
        %489 = vmatmul.mubr.f32.gmra.mrb[0].mxu0 %v359
        %v490 = vpop.f32.mrb[0].mxu0
        %v491 = vadd.f32 %v328, %v490
        %v492 = vpop.f32.mrb[0].mxu0
        %493 = vmatprep.mubr.f32.mxu0 0.0
        %494 = vmatmul.mubr.f32.gmra.mrb[0].mxu0 %v362
        %v495 = vpop.f32.mrb[0].mxu0
        %v496 = vadd.f32 %v328, %v495
        %v497 = vpop.f32.mrb[0].mxu0
        %498 = vmatprep.mubr.f32.mxu0 0.0
        %499 = vmatmul.mubr.f32.gmra.mrb[0].mxu0 %v365
        %v500 = vpop.f32.mrb[0].mxu0
        %v501 = vadd.f32 %v328, %v500
        %v502 = vpop.f32.mrb[0].mxu0
        %503 = vmatprep.mubr.f32.mxu0 0.0
        %504 = vmatmul.mubr.f32.gmra.mrb[0].mxu0 %v368
        %v505 = vpop.f32.mrb[0].mxu0
        %v506 = vadd.f32 %v328, %v505
        %v507 = vpop.f32.mrb[0].mxu0
        %508 = vmatprep.mubr.f32.mxu0 0.0
        %509 = vmatmul.mubr.f32.gmra.mrb[0].mxu0 %v371
        %v510 = vpop.f32.mrb[0].mxu0
        %v511 = vadd.f32 %v328, %v510
        %v512 = vpop.f32.mrb[0].mxu0
        %513 = vmatprep.mubr.f32.mxu0 0.0
        %514 = vmatmul.mubr.f32.gmra.mrb[0].mxu0 %v374
        %v515 = vpop.f32.mrb[0].mxu0
        %v516 = vadd.f32 %v328, %v515
        %v517 = vpop.f32.mrb[0].mxu0
        %518 = vmatprep.mubr.f32.mxu0 0.0
        %519 = vmatmul.mubr.f32.gmra.mrb[0].mxu0 %v377
        %v520 = vpop.f32.mrb[0].mxu0
        %v521 = vadd.f32 %v328, %v520
        %v522 = vpop.f32.mrb[0].mxu0
        %523 = vdwg.mxu0
        %v524 = vmax.f32 %v446, 0.0
        %v525 = vmax.f32 %v451, 0.0
        %v526 = vmax.f32 %v456, 0.0
        %v527 = vmax.f32 %v461, 0.0
        %v528 = vmax.f32 %v466, 0.0
        %v529 = vmax.f32 %v471, 0.0
        %v530 = vmax.f32 %v476, 0.0
        %v531 = vmax.f32 %v481, 0.0
        %v532 = vmax.f32 %v486, 0.0
        %v533 = vmax.f32 %v491, 0.0
        %v534 = vmax.f32 %v496, 0.0
        %v535 = vmax.f32 %v501, 0.0
        %v536 = vmax.f32 %v506, 0.0
        %v537 = vmax.f32 %v511, 0.0
        %v538 = vmax.f32 %v516, 0.0
        %v539 = vmax.f32 %v521, 0.0
        %v540 = vld [vmem:[%s3] sm:$0xff]
        %v541 = vld [vmem:[%s3 + $0x8] sm:$0xff]
        %v542 = vld [vmem:[%s3 + $0x10] sm:$0xff]
        %v543 = vld [vmem:[%s3 + $0x18] sm:$0xff]
        %v544 = vld [vmem:[%s3 + $0x20] sm:$0xff]
        %v545 = vld [vmem:[%s3 + $0x28] sm:$0xff]
        %v546 = vld [vmem:[%s3 + $0x30] sm:$0xff]
        %v547 = vld [vmem:[%s3 + $0x38] sm:$0xff]
        %v548 = vld [vmem:[%s3 + $0x40] sm:$0xff]
        %v549 = vld [vmem:[%s3 + $0x48] sm:$0xff]
        %v550 = vld [vmem:[%s3 + $0x50] sm:$0xff]
        %v551 = vld [vmem:[%s3 + $0x58] sm:$0xff]
        %v552 = vld [vmem:[%s3 + $0x60] sm:$0xff]
        %v553 = vld [vmem:[%s3 + $0x68] sm:$0xff]
        %v554 = vld [vmem:[%s3 + $0x70] sm:$0xff]
        %v555 = vld [vmem:[%s3 + $0x78] sm:$0xff]
        %v556 = vld [vmem:[%s4] sm:$0x1]
        %v558 = vlaneseq
        %v559 = vshrl.u32 %v558, 7
        %v560 = vsub.s32 0, %v559
        %v561 = vrot.slane %v556, %v560
        %563 = vmatprep.subr.mxu0 0.0
        %564 = vmatpush1.msra.mxu0 %v540
        %565 = vmatprep.subr.mxu0 0.0
        %566 = vmatpush1.msra.mxu0 %v541
        %567 = vmatprep.subr.mxu0 0.0
        %568 = vmatpush1.msra.mxu0 %v542
        %569 = vmatprep.subr.mxu0 0.0
        %570 = vmatpush1.msra.mxu0 %v543
        %571 = vmatprep.subr.mxu0 0.0
        %572 = vmatpush1.msra.mxu0 %v544
        %573 = vmatprep.subr.mxu0 0.0
        %574 = vmatpush1.msra.mxu0 %v545
        %575 = vmatprep.subr.mxu0 0.0
        %576 = vmatpush1.msra.mxu0 %v546
        %577 = vmatprep.subr.mxu0 0.0
        %578 = vmatpush1.msra.mxu0 %v547
        %579 = vmatprep.subr.mxu0 0.0
        %580 = vmatpush1.msra.mxu0 %v548
        %581 = vmatprep.subr.mxu0 0.0
        %582 = vmatpush1.msra.mxu0 %v549
        %583 = vmatprep.subr.mxu0 0.0
        %584 = vmatpush1.msra.mxu0 %v550
        %585 = vmatprep.subr.mxu0 0.0
        %586 = vmatpush1.msra.mxu0 %v551
        %587 = vmatprep.subr.mxu0 0.0
        %588 = vmatpush1.msra.mxu0 %v552
        %589 = vmatprep.subr.mxu0 0.0
        %590 = vmatpush1.msra.mxu0 %v553
        %591 = vmatprep.subr.mxu0 0.0
        %592 = vmatpush1.msra.mxu0 %v554
        %593 = vmatprep.subr.mxu0 0.0
        %594 = vmatpush1.msra.mxu0 %v555
        %595 = vmatprep.subr.mxu0 0.0
        %596 = vmatpush1.msra.mxu0 0.0
        %597 = vmatprep.subr.mxu0 0.0
        %598 = vmatpush1.msra.mxu0 0.0
        %599 = vmatprep.subr.mxu0 0.0
        %600 = vmatpush1.msra.mxu0 0.0
        %601 = vmatprep.subr.mxu0 0.0
        %602 = vmatpush1.msra.mxu0 0.0
        %603 = vmatprep.subr.mxu0 0.0
        %604 = vmatpush1.msra.mxu0 0.0
        %605 = vmatprep.subr.mxu0 0.0
        %606 = vmatpush1.msra.mxu0 0.0
        %607 = vmatprep.subr.mxu0 0.0
        %608 = vmatpush1.msra.mxu0 0.0
        %609 = vmatprep.subr.mxu0 0.0
        %610 = vmatpush1.msra.mxu0 0.0
        %611 = vmatprep.subr.mxu0 0.0
        %612 = vmatpush1.msra.mxu0 0.0
        %613 = vmatprep.subr.mxu0 0.0
        %614 = vmatpush1.msra.mxu0 0.0
        %615 = vmatprep.subr.mxu0 0.0
        %616 = vmatpush1.msra.mxu0 0.0
        %617 = vmatprep.subr.mxu0 0.0
        %618 = vmatpush1.msra.mxu0 0.0
        %619 = vmatprep.subr.mxu0 0.0
        %620 = vmatpush1.msra.mxu0 0.0
        %621 = vmatprep.subr.mxu0 0.0
        %622 = vmatpush1.msra.mxu0 0.0
        %623 = vmatprep.subr.mxu0 0.0
        %624 = vmatpush1.msra.mxu0 0.0
        %625 = vmatprep.subr.mxu0 0.0
        %626 = vmatpush1.msra.mxu0 0.0
        %627 = vmatprep.mubr.f32.mxu0 0.0
        %628 = vmatmul.mubr.f32.gmra.mrb[0].mxu0 %v524
        %v629 = vpop.f32.mrb[0].mxu0
        %v630 = vadd.f32 %v561, %v629
        %v631 = vpop.f32.mrb[0].mxu0
        %632 = vmatprep.mubr.f32.mxu0 0.0
        %633 = vmatmul.mubr.f32.gmra.mrb[0].mxu0 %v525
        %v634 = vpop.f32.mrb[0].mxu0
        %v635 = vadd.f32 %v561, %v634
        %v636 = vpop.f32.mrb[0].mxu0
        %637 = vmatprep.mubr.f32.mxu0 0.0
        %638 = vmatmul.mubr.f32.gmra.mrb[0].mxu0 %v526
        %v639 = vpop.f32.mrb[0].mxu0
        %v640 = vadd.f32 %v561, %v639
        %v641 = vpop.f32.mrb[0].mxu0
        %642 = vmatprep.mubr.f32.mxu0 0.0
        %643 = vmatmul.mubr.f32.gmra.mrb[0].mxu0 %v527
        %v644 = vpop.f32.mrb[0].mxu0
        %v645 = vadd.f32 %v561, %v644
        %v646 = vpop.f32.mrb[0].mxu0
        %647 = vmatprep.mubr.f32.mxu0 0.0
        %648 = vmatmul.mubr.f32.gmra.mrb[0].mxu0 %v528
        %v649 = vpop.f32.mrb[0].mxu0
        %v650 = vadd.f32 %v561, %v649
        %v651 = vpop.f32.mrb[0].mxu0
        %652 = vmatprep.mubr.f32.mxu0 0.0
        %653 = vmatmul.mubr.f32.gmra.mrb[0].mxu0 %v529
        %v654 = vpop.f32.mrb[0].mxu0
        %v655 = vadd.f32 %v561, %v654
        %v656 = vpop.f32.mrb[0].mxu0
        %657 = vmatprep.mubr.f32.mxu0 0.0
        %658 = vmatmul.mubr.f32.gmra.mrb[0].mxu0 %v530
        %v659 = vpop.f32.mrb[0].mxu0
        %v660 = vadd.f32 %v561, %v659
        %v661 = vpop.f32.mrb[0].mxu0
        %662 = vmatprep.mubr.f32.mxu0 0.0
        %663 = vmatmul.mubr.f32.gmra.mrb[0].mxu0 %v531
        %v664 = vpop.f32.mrb[0].mxu0
        %v665 = vadd.f32 %v561, %v664
        %v666 = vpop.f32.mrb[0].mxu0
        %667 = vmatprep.mubr.f32.mxu0 0.0
        %668 = vmatmul.mubr.f32.gmra.mrb[0].mxu0 %v532
        %v669 = vpop.f32.mrb[0].mxu0
        %v670 = vadd.f32 %v561, %v669
        %v671 = vpop.f32.mrb[0].mxu0
        %672 = vmatprep.mubr.f32.mxu0 0.0
        %673 = vmatmul.mubr.f32.gmra.mrb[0].mxu0 %v533
        %v674 = vpop.f32.mrb[0].mxu0
        %v675 = vadd.f32 %v561, %v674
        %v676 = vpop.f32.mrb[0].mxu0
        %677 = vmatprep.mubr.f32.mxu0 0.0
        %678 = vmatmul.mubr.f32.gmra.mrb[0].mxu0 %v534
        %v679 = vpop.f32.mrb[0].mxu0
        %v680 = vadd.f32 %v561, %v679
        %v681 = vpop.f32.mrb[0].mxu0
        %682 = vmatprep.mubr.f32.mxu0 0.0
        %683 = vmatmul.mubr.f32.gmra.mrb[0].mxu0 %v535
        %v684 = vpop.f32.mrb[0].mxu0
        %v685 = vadd.f32 %v561, %v684
        %v686 = vpop.f32.mrb[0].mxu0
        %687 = vmatprep.mubr.f32.mxu0 0.0
        %688 = vmatmul.mubr.f32.gmra.mrb[0].mxu0 %v536
        %v689 = vpop.f32.mrb[0].mxu0
        %v690 = vadd.f32 %v561, %v689
        %v691 = vpop.f32.mrb[0].mxu0
        %692 = vmatprep.mubr.f32.mxu0 0.0
        %693 = vmatmul.mubr.f32.gmra.mrb[0].mxu0 %v537
        %v694 = vpop.f32.mrb[0].mxu0
        %v695 = vadd.f32 %v561, %v694
        %v696 = vpop.f32.mrb[0].mxu0
        %697 = vmatprep.mubr.f32.mxu0 0.0
        %698 = vmatmul.mubr.f32.gmra.mrb[0].mxu0 %v538
        %v699 = vpop.f32.mrb[0].mxu0
        %v700 = vadd.f32 %v561, %v699
        %v701 = vpop.f32.mrb[0].mxu0
        %702 = vmatprep.mubr.f32.mxu0 0.0
        %703 = vmatmul.mubr.f32.gmra.mrb[0].mxu0 %v539
        %v704 = vpop.f32.mrb[0].mxu0
        %v705 = vadd.f32 %v561, %v704
        %v706 = vpop.f32.mrb[0].mxu0
        %707 = vdwg.mxu0
        %v708 = vmax.f32 %v630, 0.0
        %v709 = vmax.f32 %v635, 0.0
        %v710 = vmax.f32 %v640, 0.0
        %v711 = vmax.f32 %v645, 0.0
        %v712 = vmax.f32 %v650, 0.0
        %v713 = vmax.f32 %v655, 0.0
        %v714 = vmax.f32 %v660, 0.0
        %v715 = vmax.f32 %v665, 0.0
        %v716 = vmax.f32 %v670, 0.0
        %v717 = vmax.f32 %v675, 0.0
        %v718 = vmax.f32 %v680, 0.0
        %v719 = vmax.f32 %v685, 0.0
        %v720 = vmax.f32 %v690, 0.0
        %v721 = vmax.f32 %v695, 0.0
        %v722 = vmax.f32 %v700, 0.0
        %v723 = vmax.f32 %v705, 0.0
        %v724 = vld [vmem:[%s5] sm:$0xff]
        %v726 = vsel %vm330, %v724, 0
        %v729 = vsel %vm330, %v708, 0
        %v732 = vsel %vm330, %v709, 0
        %v735 = vsel %vm330, %v710, 0
        %v738 = vsel %vm330, %v711, 0
        %v741 = vsel %vm330, %v712, 0
        %v744 = vsel %vm330, %v713, 0
        %v747 = vsel %vm330, %v714, 0
        %v750 = vsel %vm330, %v715, 0
        %v753 = vsel %vm330, %v716, 0
        %v756 = vsel %vm330, %v717, 0
        %v759 = vsel %vm330, %v718, 0
        %v762 = vsel %vm330, %v719, 0
        %v765 = vsel %vm330, %v720, 0
        %v768 = vsel %vm330, %v721, 0
        %v771 = vsel %vm330, %v722, 0
        %v774 = vsel %vm330, %v723, 0
        %776 = vmatprep.subr.mxu0 0.0
        %777 = vmatpush1.xpose.msra.mxu0 %v729
        %778 = vmatprep.subr.mxu0 0.0
        %779 = vmatpush1.xpose.msra.mxu0 %v732
        %780 = vmatprep.subr.mxu0 0.0
        %781 = vmatpush1.xpose.msra.mxu0 %v735
        %782 = vmatprep.subr.mxu0 0.0
        %783 = vmatpush1.xpose.msra.mxu0 %v738
        %784 = vmatprep.subr.mxu0 0.0
        %785 = vmatpush1.xpose.msra.mxu0 %v741
        %786 = vmatprep.subr.mxu0 0.0
        %787 = vmatpush1.xpose.msra.mxu0 %v744
        %788 = vmatprep.subr.mxu0 0.0
        %789 = vmatpush1.xpose.msra.mxu0 %v747
        %790 = vmatprep.subr.mxu0 0.0
        %791 = vmatpush1.xpose.msra.mxu0 %v750
        %792 = vmatprep.subr.mxu0 0.0
        %793 = vmatpush1.xpose.msra.mxu0 %v753
        %794 = vmatprep.subr.mxu0 0.0
        %795 = vmatpush1.xpose.msra.mxu0 %v756
        %796 = vmatprep.subr.mxu0 0.0
        %797 = vmatpush1.xpose.msra.mxu0 %v759
        %798 = vmatprep.subr.mxu0 0.0
        %799 = vmatpush1.xpose.msra.mxu0 %v762
        %800 = vmatprep.subr.mxu0 0.0
        %801 = vmatpush1.xpose.msra.mxu0 %v765
        %802 = vmatprep.subr.mxu0 0.0
        %803 = vmatpush1.xpose.msra.mxu0 %v768
        %804 = vmatprep.subr.mxu0 0.0
        %805 = vmatpush1.xpose.msra.mxu0 %v771
        %806 = vmatprep.subr.mxu0 0.0
        %807 = vmatpush1.xpose.msra.mxu0 %v774
        %808 = vmatprep.subr.mxu0 0.0
        %809 = vmatpush1.xpose.msra.mxu0 0.0
        %810 = vmatprep.subr.mxu0 0.0
        %811 = vmatpush1.xpose.msra.mxu0 0.0
        %812 = vmatprep.subr.mxu0 0.0
        %813 = vmatpush1.xpose.msra.mxu0 0.0
        %814 = vmatprep.subr.mxu0 0.0
        %815 = vmatpush1.xpose.msra.mxu0 0.0
        %816 = vmatprep.subr.mxu0 0.0
        %817 = vmatpush1.xpose.msra.mxu0 0.0
        %818 = vmatprep.subr.mxu0 0.0
        %819 = vmatpush1.xpose.msra.mxu0 0.0
        %820 = vmatprep.subr.mxu0 0.0
        %821 = vmatpush1.xpose.msra.mxu0 0.0
        %822 = vmatprep.subr.mxu0 0.0
        %823 = vmatpush1.xpose.msra.mxu0 0.0
        %824 = vmatprep.subr.mxu0 0.0
        %825 = vmatpush1.xpose.msra.mxu0 0.0
        %826 = vmatprep.subr.mxu0 0.0
        %827 = vmatpush1.xpose.msra.mxu0 0.0
        %828 = vmatprep.subr.mxu0 0.0
        %829 = vmatpush1.xpose.msra.mxu0 0.0
        %830 = vmatprep.subr.mxu0 0.0
        %831 = vmatpush1.xpose.msra.mxu0 0.0
        %832 = vmatprep.subr.mxu0 0.0
        %833 = vmatpush1.xpose.msra.mxu0 0.0
        %834 = vmatprep.subr.mxu0 0.0
        %835 = vmatpush1.xpose.msra.mxu0 0.0
        %836 = vmatprep.subr.mxu0 0.0
        %837 = vmatpush1.xpose.msra.mxu0 0.0
        %838 = vmatprep.subr.mxu0 0.0
        %839 = vmatpush1.xpose.msra.mxu0 0.0
        %840 = vmatprep.mubr.f32.mxu0 0.0
        %841 = vmatmul.mubr.f32.gmra.mrb[0].mxu0 %v726
        %v842 = vpop.f32.mrb[0].mxu0
        %v843 = vadd.f32 0.0, %v842
        %v844 = vpop.f32.mrb[0].mxu0
        %845 = vdwg.mxu0
        %s846 = sld [smem:[#allocation2]]
        %v847 = vstv %s846
        %v848 = vadd.f32 %v843, %v847
        %849 = vst [vmem:[%s284] sm:$0x1] %v848
        %s850 = sand.u32 %s182, 1
        %s851 = scalar_lea.sflag [#allocation4], %s850
        %s852 = sand.u32 %s182, 1
        %s853 = scalar_lea.vmem [#allocation3], %s852
        // Predicated region
        $region49: #{tpu_custom_call.1} parent=47 // pred_check
          %p854 = pneg %p192
        $region50: #{tpu_custom_call.1} parent=47 // pred_check_branch
          %856 = sbr.rel (%p854) target = $region52
        $region51: #{tpu_custom_call.1} parent=47 // pred_region
          %s858 = ssub.s32 16, 16
          %859 = vsyncadd %s851, %s858
          %s860 = smul.addr %s22, 16
          %s861 = scalar_lea.hbm %s7, %s860
          %s863 = sshll.u32 %s853, 4
          %s864 = int_to_ptr.vmem [resolvable:$true] %s863
          %866 = dma.vmem_to_hbm [thread:$0]  %s864, 16, %s861, %s851
        $region52: #{tpu_custom_call.1} parent=47 // pred_fallthru
          _
      $region48: #{tpu_custom_call.1} parent=5 // pred_fallthru
        _
      %p867 = scmp.le.s32.totalorder 2, %s17
      // Predicated region
      $region53: #{tpu_custom_call.1} parent=5 // pred_check
        %p868 = pneg %p867
      $region54: #{tpu_custom_call.1} parent=5 // pred_check_branch
        %870 = sbr.rel (%p868) target = $region56
      $region55: #{tpu_custom_call.1} parent=5 // pred_region
        %s871 = ssub.s32 %s17, 2
        // Predicated region
        $region57: #{tpu_custom_call.1} parent=55 // pred_check
          %p872 = pneg %p198
        $region58: #{tpu_custom_call.1} parent=55 // pred_check_branch
          %874 = sbr.rel (%p872) target = $region60
        $region59: #{tpu_custom_call.1} parent=55 // pred_region
          %s875 = sand.u32 %s183, 1
          %s876 = scalar_lea.sflag [#allocation4], %s875
          %s877 = sand.u32 %s183, 1
          %s878 = scalar_lea.vmem [#allocation3], %s877
          %879 = dma.done %s876, 16
        $region60: #{tpu_custom_call.1} parent=55 // pred_fallthru
          _
      $region56: #{tpu_custom_call.1} parent=5 // pred_fallthru
        _
    $region6: #{tpu_custom_call.1} parent=1 // loop_footer
      %s21 = sadd.s32 1, %s17
    $region7: #{tpu_custom_call.1} parent=1 // loop_footer_branch
      %16 = sbr.rel target = $region3
    $region8: #{tpu_custom_call.1} parent=1 // loop_exit
      _
    %880 = vsyncpa [#allocation4], 1
    %s881 = scalar_lea.sflag [#allocation4], 1
    %882 = vsyncpa %s881, 1

</llo_original>
